<compile_context>
chip_gen: v7x
topology: tpu7x:2x2x1
jax: 0.10.0
libtpu: 0.0.40
codegen_flags: <defaults>
</compile_context>

<pallas_src>
import jax
import jax.numpy as jnp
from jax import lax
from jax.experimental import pallas as pl
from jax.experimental.pallas import tpu as pltpu


def _round_up(x, m):
    return (x + m - 1) // m * m


def piecewise_cnn_kernel(x_ref, w_ref, mask_ref, b_ref, o_ref):
    """Single step over ALL pieces: flat matmul -> +mask -> max over length -> +bias -> tanh.

    x_ref:    (Lout*PBpad, K*Cin) bf16  im2col patches, rows l-major (row = l*PBpad + pb)
    w_ref:    (K*Cin, Npad)       bf16  conv weights, Cout zero-padded to 128 lanes
    mask_ref: (Lout*PBpad, 1)     f32   additive mask: 0 on valid conv positions, -inf past
                                        each row's true output length
    b_ref:    (1, Npad)           f32   bias, zero-padded to 128 lanes
    o_ref:    (PBpad, Npad)       f32   lane-dense output slab
    """
    pbpad, _ = o_ref.shape
    lout = x_ref.shape[0] // pbpad

    # Conv1d for every (piece, batch, position) row as ONE 2-D MXU matmul
    # (bf16 operands, f32 accumulation).
    acc = jnp.dot(x_ref[...], w_ref[...],
                  preferred_element_type=jnp.float32)          # (Lout*PBpad, Npad) f32

    # Precomputed additive validity mask (lane-broadcast of a single column).
    acc = acc + mask_ref[...]

    # Max over the length axis.  PBpad % 8 == 0 and Npad == 128, so each slab
    # acc[l*PBpad:(l+1)*PBpad, :] is whole vreg tiles in matmul-native layout:
    # the reduction is (Lout-1) elementwise maxima, unrolled (Lout small & static).
    m = acc[0:pbpad, :]
    for l in range(1, lout):
        m = jnp.maximum(m, acc[l * pbpad:(l + 1) * pbpad, :])

    # Bias is position-independent -> commutes with the max; f32 epilogue, EUP tanh,
    # one unmasked lane-dense store.
    o_ref[...] = jnp.tanh(m + b_ref[...]).astype(o_ref.dtype)


def piecewise_cnn(pieces, weight, bias, padding=2):
    """pieces: list of (B, Cin, Li) arrays.  Returns (B, Cout, num_pieces) f32."""
    Cout, Cin, K = weight.shape
    B = pieces[0].shape[0]
    P = len(pieces)
    lengths = [int(p.shape[2]) for p in pieces]
    Lmax = max(lengths)
    Lpad = Lmax + 2 * padding
    Lout = Lpad - K + 1
    valid_lens = [l + 2 * padding - K + 1 for l in lengths]
    # If a piece were so short that its conv output is empty, the masked max would be
    # -inf (tanh -> -1) rather than matching PyTorch's error on an empty reduction.
    assert min(valid_lens) >= 1, "piece too short for this kernel_size/padding"

    PB = P * B
    PBpad = _round_up(PB, 8)        # f32 sublane tile
    Npad = _round_up(Cout, 128)     # lane-dense output -> unmasked stores

    # ---- wrapper-side layout plumbing (static shapes, one fused pass) ------------
    # One padded buffer for all pieces (P small updates since lengths differ),
    # then a single cast / transpose / im2col / reorder.
    xpad = jnp.zeros((P, B, Cin, Lpad), jnp.float32)
    for p, piece in enumerate(pieces):
        Li = piece.shape[2]
        xpad = xpad.at[p, :, :, padding:padding + Li].set(piece.astype(jnp.float32))
    xpad = xpad.astype(jnp.bfloat16)

    xc = jnp.transpose(xpad, (0, 1, 3, 2))                              # (P, B, Lpad, Cin)
    win = jnp.stack([xc[:, :, k:k + Lout, :] for k in range(K)], axis=3)  # (P,B,Lout,K,Cin)
    x_col = win.reshape(P, B, Lout, K * Cin)
    # l-major rows (l, p, b); pad the folded (p, b) axis up to PBpad.
    x_col = jnp.transpose(x_col, (2, 0, 1, 3)).reshape(Lout, PB, K * Cin)
    x_col = jnp.pad(x_col, ((0, 0), (0, PBpad - PB), (0, 0)))
    x_col = x_col.reshape(Lout * PBpad, K * Cin)                        # (Lout*PBpad, K*Cin)

    # weight (Cout, Cin, K) -> (K*Cin, Npad) so flat tap index k*Cin + c matches im2col.
    w2 = jnp.transpose(weight, (2, 1, 0)).reshape(K * Cin, Cout).astype(jnp.bfloat16)
    w2 = jnp.pad(w2, ((0, 0), (0, Npad - Cout)))
    b2 = jnp.pad(bias.astype(jnp.float32).reshape(1, Cout), ((0, 0), (0, Npad - Cout)))

    # Additive validity mask: 0 where conv position < valid length, -inf otherwise.
    vl = jnp.repeat(jnp.array(valid_lens, jnp.int32), B)                # (PB,)
    vl = jnp.pad(vl, (0, PBpad - PB), constant_values=Lout)             # pad rows: harmless
    pos = jnp.arange(Lout, dtype=jnp.int32)[:, None]                    # (Lout, 1)
    mask = jnp.where(pos < vl[None, :], 0.0, -jnp.inf).astype(jnp.float32)
    mask = mask.reshape(Lout * PBpad, 1)

    cost = pl.CostEstimate(
        flops=2 * Lout * PBpad * (K * Cin) * Cout,
        transcendentals=PBpad * Cout,
        bytes_accessed=(x_col.size * 2 + w2.size * 2 + mask.size * 4 +
                        b2.size * 4 + PBpad * Npad * 4),
    )

    out = pl.pallas_call(
        piecewise_cnn_kernel,
        out_shape=jax.ShapeDtypeStruct((PBpad, Npad), jnp.float32),
        # Single invocation (no grid): whole problem lives in VMEM for the one step.
        in_specs=[
            pl.BlockSpec(memory_space=pltpu.MemorySpace.VMEM),   # x_col
            pl.BlockSpec(memory_space=pltpu.MemorySpace.VMEM),   # w2
            pl.BlockSpec(memory_space=pltpu.MemorySpace.VMEM),   # mask
            pl.BlockSpec(memory_space=pltpu.MemorySpace.VMEM),   # b2
        ],
        out_specs=pl.BlockSpec(memory_space=pltpu.MemorySpace.VMEM),
        compiler_params=pltpu.CompilerParams(vmem_limit_bytes=32 * 1024 * 1024),
        cost_estimate=cost,
    )(x_col, w2, mask, b2)

    out = out[:PB, :Cout].reshape(P, B, Cout)
    return jnp.transpose(out, (1, 2, 0))                                # (B, Cout, P)


def reference(pieces, weight, bias, padding=2):
    """Pure-JAX golden reference matching the PyTorch forward (full f32 precision)."""
    outs = []
    for piece in pieces:
        y = lax.conv_general_dilated(
            piece.astype(jnp.float32), weight.astype(jnp.float32),
            window_strides=(1,), padding=[(padding, padding)],
            dimension_numbers=('NCH', 'OIH', 'NCH'),
            precision=lax.Precision.HIGHEST)
        y = y + bias.reshape(1, -1, 1)
        outs.append(jnp.tanh(jnp.max(y, axis=2)))
    return jnp.stack(outs, axis=2)                                      # (B, Cout, P)


if __name__ == "__main__":
    B, CIN, COUT, K, PAD = 2, 4, 8, 3, 2
    piece_lens = [8, 6, 8]                                              # variable-length pieces

    key = jax.random.PRNGKey(0)
    kw, kb, *kp = jax.random.split(key, 2 + len(piece_lens))

    # Deterministic parameter init (PyTorch-style uniform bound for Conv1d).
    bound = 1.0 / (CIN * K) ** 0.5
    weight = jax.random.uniform(kw, (COUT, CIN, K), jnp.float32, -bound, bound)
    bias = jax.random.uniform(kb, (COUT,), jnp.float32, -bound, bound)

    pieces = [jax.random.normal(k, (B, CIN, L), jnp.float32)
              for k, L in zip(kp, piece_lens)]

    out = piecewise_cnn(pieces, weight, bias, padding=PAD)
    out = jax.block_until_ready(out)

    ref = reference(pieces, weight, bias, padding=PAD)
    assert out.shape == (B, COUT, len(piece_lens)), out.shape
    # Tolerance accounts for bf16 matmul operands (single-pass MXU) vs. the f32
    # HIGHEST-precision reference; with a 12-element contraction the error is <<1e-2.
    assert jnp.allclose(out, ref, rtol=1e-2, atol=1e-2), \
        f"max abs err = {jnp.max(jnp.abs(out - ref))}"

    print("KERNEL_OK")
</pallas_src>

<mosaic_0001>
module attributes {stable_mosaic.version = 11 : i64} {
  func.func @piecewise_cnn_kernel(%arg0: memref<80x12xbf16, #tpu.memory_space<vmem>>, %arg1: memref<12x128xbf16, #tpu.memory_space<vmem>>, %arg2: memref<80x1xf32, #tpu.memory_space<vmem>>, %arg3: memref<1x128xf32, #tpu.memory_space<vmem>>, %arg4: memref<8x128xf32, #tpu.memory_space<vmem>>) attributes {dimension_semantics = [], scalar_prefetch = 0 : i64, scratch_operands = 0 : i64, tpu.core_type = #tpu.core_type<tc>} {
    %c0 = arith.constant 0 : index
    %c0_0 = arith.constant 0 : index
    %0 = vector.load %arg0[%c0, %c0_0] : memref<80x12xbf16, #tpu.memory_space<vmem>>, vector<80x12xbf16>
    %c0_1 = arith.constant 0 : index
    %c0_2 = arith.constant 0 : index
    %1 = vector.load %arg1[%c0_1, %c0_2] : memref<12x128xbf16, #tpu.memory_space<vmem>>, vector<12x128xbf16>
    %cst = arith.constant dense<0.000000e+00> : vector<80x128xf32>
    %2 = tpu.matmul %0, %1, %cst {dimension_numbers = #tpu.dot_dimension_numbers<[1], [0], [0], [1], [0, 0, 1, 1], [], []>} : vector<80x12xbf16>, vector<12x128xbf16>, vector<80x128xf32> -> vector<80x128xf32>
    %c0_3 = arith.constant 0 : index
    %c0_4 = arith.constant 0 : index
    %3 = vector.load %arg2[%c0_3, %c0_4] : memref<80x1xf32, #tpu.memory_space<vmem>>, vector<80x1xf32>
    %4 = vector.broadcast %3 : vector<80x1xf32> to vector<80x128xf32>
    %5 = arith.addf %2, %4 : vector<80x128xf32>
    %6 = vector.extract_strided_slice %5 {offsets = [0, 0], sizes = [8, 128], strides = [1, 1]} : vector<80x128xf32> to vector<8x128xf32>
    %7 = vector.extract_strided_slice %5 {offsets = [8, 0], sizes = [8, 128], strides = [1, 1]} : vector<80x128xf32> to vector<8x128xf32>
    %8 = arith.maximumf %6, %7 : vector<8x128xf32>
    %9 = vector.extract_strided_slice %5 {offsets = [16, 0], sizes = [8, 128], strides = [1, 1]} : vector<80x128xf32> to vector<8x128xf32>
    %10 = arith.maximumf %8, %9 : vector<8x128xf32>
    %11 = vector.extract_strided_slice %5 {offsets = [24, 0], sizes = [8, 128], strides = [1, 1]} : vector<80x128xf32> to vector<8x128xf32>
    %12 = arith.maximumf %10, %11 : vector<8x128xf32>
    %13 = vector.extract_strided_slice %5 {offsets = [32, 0], sizes = [8, 128], strides = [1, 1]} : vector<80x128xf32> to vector<8x128xf32>
    %14 = arith.maximumf %12, %13 : vector<8x128xf32>
    %15 = vector.extract_strided_slice %5 {offsets = [40, 0], sizes = [8, 128], strides = [1, 1]} : vector<80x128xf32> to vector<8x128xf32>
    %16 = arith.maximumf %14, %15 : vector<8x128xf32>
    %17 = vector.extract_strided_slice %5 {offsets = [48, 0], sizes = [8, 128], strides = [1, 1]} : vector<80x128xf32> to vector<8x128xf32>
    %18 = arith.maximumf %16, %17 : vector<8x128xf32>
    %19 = vector.extract_strided_slice %5 {offsets = [56, 0], sizes = [8, 128], strides = [1, 1]} : vector<80x128xf32> to vector<8x128xf32>
    %20 = arith.maximumf %18, %19 : vector<8x128xf32>
    %21 = vector.extract_strided_slice %5 {offsets = [64, 0], sizes = [8, 128], strides = [1, 1]} : vector<80x128xf32> to vector<8x128xf32>
    %22 = arith.maximumf %20, %21 : vector<8x128xf32>
    %23 = vector.extract_strided_slice %5 {offsets = [72, 0], sizes = [8, 128], strides = [1, 1]} : vector<80x128xf32> to vector<8x128xf32>
    %24 = arith.maximumf %22, %23 : vector<8x128xf32>
    %c0_5 = arith.constant 0 : index
    %c0_6 = arith.constant 0 : index
    %25 = vector.load %arg3[%c0_5, %c0_6] : memref<1x128xf32, #tpu.memory_space<vmem>>, vector<1x128xf32>
    %26 = vector.broadcast %25 : vector<1x128xf32> to vector<8x128xf32>
    %27 = arith.addf %24, %26 : vector<8x128xf32>
    %28 = math.tanh %27 : vector<8x128xf32>
    %c0_7 = arith.constant 0 : index
    %c0_8 = arith.constant 0 : index
    %29 = vector.load %arg4[%c0_7, %c0_8] : memref<8x128xf32, #tpu.memory_space<vmem>>, vector<8x128xf32>
    tpu.vector_store %arg4[%c0_7, %c0_8], %28 {strides = array<i32>} : memref<8x128xf32, #tpu.memory_space<vmem>>, vector<8x128xf32>,
    return
  }
}

</mosaic_0001>

<llo_original>
// kernel: tpu_custom_call.1
$region0: #{tpu_custom_call.1}
  #allocation0 [shape = 'u32[]', space=smem, size = 0x4, offset = 0x4, fixed_abs, tag = 'smem constant byte address 0x4 - core index']
  #allocation1 [shape = 'u32[144,128]{1,0:T(1,128)}', space=vmem, size = 0x12000, scoped, tag = 'internal scratch']
  %s0 = inlined_call_operand.vmem [shape: bf16[80,12], index: 0, kind: input, shape index: {}]
  %s1 = inlined_call_operand.vmem [shape: bf16[12,128], index: 1, kind: input, shape index: {}]
  %s2 = inlined_call_operand.vmem [shape: f32[80,1], index: 2, kind: input, shape index: {}]
  %s3 = inlined_call_operand.vmem [shape: f32[1,128], index: 3, kind: input, shape index: {}]
  %s4 = inlined_call_operand.hbm [shape: f32[8,128], index: 4, kind: output, shape index: {}]
  %s5 = sld [smem:[#allocation0]]
  $region26: #{tpu_custom_call.1} parent=0
    _
  %s7 = ssub.s32 1, %s5
  %s8 = scalar_select 0, %s7, %s5
  $region1: #{tpu_custom_call.1} parent=0
    #allocation2 [shape = 'u8[4096]{0}', space=vmem, size = 0x1000, scoped, tag = 'output window, operand 0, single buffered']
    #allocation3 [shape = 's32[1]{0}', space=sflag, size = 0x4, scoped, tag = 'scoped memory for tpu_custom_call.1']
    %9 = vsyncpa [#allocation3], 0
    // Predicated region
    $region2: #{tpu_custom_call.1} parent=1 // pred_check
      _
    $region3: #{tpu_custom_call.1} parent=1 // pred_check_branch
      %11 = sbr.rel (0) target = $region5
    $region4: #{tpu_custom_call.1} parent=1 // pred_region
      _
    $region5: #{tpu_custom_call.1} parent=1 // pred_fallthru
      _
    // Predicated region
    $region6: #{tpu_custom_call.1} parent=1 // pred_check
      _
    $region7: #{tpu_custom_call.1} parent=1 // pred_check_branch
      %13 = sbr.rel (0) target = $region9
    $region8: #{tpu_custom_call.1} parent=1 // pred_region
      _
    $region9: #{tpu_custom_call.1} parent=1 // pred_fallthru
      _
    // Predicated region
    $region10: #{tpu_custom_call.1} parent=1 // pred_check
      _
    $region11: #{tpu_custom_call.1} parent=1 // pred_check_branch
      %15 = sbr.rel (0) target = $region13
    $region12: #{tpu_custom_call.1} parent=1 // pred_region
      _
    $region13: #{tpu_custom_call.1} parent=1 // pred_fallthru
      _
    // Predicated region
    $region14: #{tpu_custom_call.1} parent=1 // pred_check
      _
    $region15: #{tpu_custom_call.1} parent=1 // pred_check_branch
      %17 = sbr.rel (0) target = $region17
    $region16: #{tpu_custom_call.1} parent=1 // pred_region
      _
    $region17: #{tpu_custom_call.1} parent=1 // pred_fallthru
      _
    %v19 = vld [vmem:[%s0] sm:$0xf]
    %v20 = vld [vmem:[%s0 + $0x4] sm:$0xf]
    %v21 = vld [vmem:[%s0 + $0x8] sm:$0xf]
    %v22 = vld [vmem:[%s0 + $0xc] sm:$0xf]
    %v23 = vld [vmem:[%s0 + $0x10] sm:$0xf]
    %v24 = vld [vmem:[%s0 + $0x14] sm:$0xf]
    %v25 = vld [vmem:[%s0 + $0x18] sm:$0xf]
    %v26 = vld [vmem:[%s0 + $0x1c] sm:$0xf]
    %v27 = vld [vmem:[%s0 + $0x20] sm:$0xf]
    %v28 = vld [vmem:[%s0 + $0x24] sm:$0xf]
    %v29 = vld [vmem:[%s1] sm:$0xf]
    %v30 = vld [vmem:[%s1 + $0x4] sm:$0x3]
    %v31 = vld [vmem:[%s2] sm:$0xff]
    %v32 = vld [vmem:[%s2 + $0x8] sm:$0xff]
    %v33 = vld [vmem:[%s2 + $0x10] sm:$0xff]
    %v34 = vld [vmem:[%s2 + $0x18] sm:$0xff]
    %v35 = vld [vmem:[%s2 + $0x20] sm:$0xff]
    %v36 = vld [vmem:[%s2 + $0x28] sm:$0xff]
    %v37 = vld [vmem:[%s2 + $0x30] sm:$0xff]
    %v38 = vld [vmem:[%s2 + $0x38] sm:$0xff]
    %v39 = vld [vmem:[%s2 + $0x40] sm:$0xff]
    %v40 = vld [vmem:[%s2 + $0x48] sm:$0xff]
    %42 = vset.pattern.permute.xlu0 0
    %43 = vperm.xlu0 %42, %v31
    %v44 = vpop.permute.xlu0 %43
    %47 = vset.pattern.permute.xlu0 0
    %48 = vperm.xlu0 %47, %v32
    %v49 = vpop.permute.xlu0 %48
    %52 = vset.pattern.permute.xlu0 0
    %53 = vperm.xlu0 %52, %v33
    %v54 = vpop.permute.xlu0 %53
    %57 = vset.pattern.permute.xlu0 0
    %58 = vperm.xlu0 %57, %v34
    %v59 = vpop.permute.xlu0 %58
    %62 = vset.pattern.permute.xlu0 0
    %63 = vperm.xlu0 %62, %v35
    %v64 = vpop.permute.xlu0 %63
    %67 = vset.pattern.permute.xlu0 0
    %68 = vperm.xlu0 %67, %v36
    %v69 = vpop.permute.xlu0 %68
    %72 = vset.pattern.permute.xlu0 0
    %73 = vperm.xlu0 %72, %v37
    %v74 = vpop.permute.xlu0 %73
    %77 = vset.pattern.permute.xlu0 0
    %78 = vperm.xlu0 %77, %v38
    %v79 = vpop.permute.xlu0 %78
    %82 = vset.pattern.permute.xlu0 0
    %83 = vperm.xlu0 %82, %v39
    %v84 = vpop.permute.xlu0 %83
    %87 = vset.pattern.permute.xlu0 0
    %88 = vperm.xlu0 %87, %v40
    %v89 = vpop.permute.xlu0 %88
    %v101 = vunpack.c.l.b16 %v19
    %v102 = vunpack.c.l.b16 %v20
    %v103 = vunpack.c.l.b16 %v21
    %v104 = vunpack.c.l.b16 %v22
    %v105 = vunpack.c.l.b16 %v23
    %v106 = vunpack.c.l.b16 %v24
    %v107 = vunpack.c.l.b16 %v25
    %v108 = vunpack.c.l.b16 %v26
    %v109 = vunpack.c.l.b16 %v27
    %v110 = vunpack.c.l.b16 %v28
    %v111 = vpack.c.b16 %v102, %v101
    %v112 = vpack.c.b16 %v104, %v103
    %v113 = vpack.c.b16 %v106, %v105
    %v114 = vpack.c.b16 %v108, %v107
    %v115 = vpack.c.b16 %v110, %v109
    %v118 = vunpack.c.l.b16 %v29
    %v119 = vunpack.c.l.b16 %v30
    %v120 = vpack.c.b16 %v119, %v118
    %vm121 = vcmask 97280
    %v123 = vsel %vm121, %v111, 0
    %v126 = vsel %vm121, %v112, 0
    %v129 = vsel %vm121, %v113, 0
    %v132 = vsel %vm121, %v114, 0
    %v135 = vsel %vm121, %v115, 0
    %vm137 = vcmask 1045504
    %v139 = vsel %vm137, %v120, 0
    %141 = vmatprep.subr.bf16.mxu0 0
    %142 = vmatpush1.bf16.msra.mxu0 %v139
    %143 = vmatprep.subr.bf16.mxu0 0
    %144 = vmatpush1.bf16.msra.mxu0 0
    %145 = vmatprep.subr.bf16.mxu0 0
    %146 = vmatpush1.bf16.msra.mxu0 0
    %147 = vmatprep.subr.bf16.mxu0 0
    %148 = vmatpush1.bf16.msra.mxu0 0
    %149 = vmatprep.subr.bf16.mxu0 0
    %150 = vmatpush1.bf16.msra.mxu0 0
    %151 = vmatprep.subr.bf16.mxu0 0
    %152 = vmatpush1.bf16.msra.mxu0 0
    %153 = vmatprep.subr.bf16.mxu0 0
    %154 = vmatpush1.bf16.msra.mxu0 0
    %155 = vmatprep.subr.bf16.mxu0 0
    %156 = vmatpush1.bf16.msra.mxu0 0
    %157 = vmatprep.subr.bf16.mxu0 0
    %158 = vmatpush1.bf16.msra.mxu0 0
    %159 = vmatprep.subr.bf16.mxu0 0
    %160 = vmatpush1.bf16.msra.mxu0 0
    %161 = vmatprep.subr.bf16.mxu0 0
    %162 = vmatpush1.bf16.msra.mxu0 0
    %163 = vmatprep.subr.bf16.mxu0 0
    %164 = vmatpush1.bf16.msra.mxu0 0
    %165 = vmatprep.subr.bf16.mxu0 0
    %166 = vmatpush1.bf16.msra.mxu0 0
    %167 = vmatprep.subr.bf16.mxu0 0
    %168 = vmatpush1.bf16.msra.mxu0 0
    %169 = vmatprep.subr.bf16.mxu0 0
    %170 = vmatpush1.bf16.msra.mxu0 0
    %171 = vmatprep.subr.bf16.mxu0 0
    %172 = vmatpush1.bf16.msra.mxu0 0
    %173 = vmatprep.mubr.bf16.mxu0 0
    %174 = vmatmul.mubr.bf16.gmra.mrb[0].mxu0 %v123
    %v175 = vpop.f32.mrb[0].mxu0
    %v176 = vadd.f32 %v44, %v175
    %v177 = vpop.f32.mrb[0].mxu0
    %v178 = vpop.f32.mrb[0].mxu0
    %v179 = vadd.f32 %v49, %v178
    %v180 = vpop.f32.mrb[0].mxu0
    %181 = vmatprep.mubr.bf16.mxu0 0
    %182 = vmatmul.mubr.bf16.gmra.mrb[0].mxu0 %v126
    %v183 = vpop.f32.mrb[0].mxu0
    %v184 = vadd.f32 %v54, %v183
    %v185 = vpop.f32.mrb[0].mxu0
    %v186 = vpop.f32.mrb[0].mxu0
    %v187 = vadd.f32 %v59, %v186
    %v188 = vpop.f32.mrb[0].mxu0
    %189 = vmatprep.mubr.bf16.mxu0 0
    %190 = vmatmul.mubr.bf16.gmra.mrb[0].mxu0 %v129
    %v191 = vpop.f32.mrb[0].mxu0
    %v192 = vadd.f32 %v64, %v191
    %v193 = vpop.f32.mrb[0].mxu0
    %v194 = vpop.f32.mrb[0].mxu0
    %v195 = vadd.f32 %v69, %v194
    %v196 = vpop.f32.mrb[0].mxu0
    %197 = vmatprep.mubr.bf16.mxu0 0
    %198 = vmatmul.mubr.bf16.gmra.mrb[0].mxu0 %v132
    %v199 = vpop.f32.mrb[0].mxu0
    %v200 = vadd.f32 %v74, %v199
    %v201 = vpop.f32.mrb[0].mxu0
    %v202 = vpop.f32.mrb[0].mxu0
    %v203 = vadd.f32 %v79, %v202
    %v204 = vpop.f32.mrb[0].mxu0
    %205 = vmatprep.mubr.bf16.mxu0 0
    %206 = vmatmul.mubr.bf16.gmra.mrb[0].mxu0 %v135
    %v207 = vpop.f32.mrb[0].mxu0
    %v208 = vadd.f32 %v84, %v207
    %v209 = vpop.f32.mrb[0].mxu0
    %v210 = vpop.f32.mrb[0].mxu0
    %v211 = vadd.f32 %v89, %v210
    %v212 = vpop.f32.mrb[0].mxu0
    %213 = vdwg.mxu0
    %v214 = vmax.f32 %v176, %v179
    %v215 = vmax.f32 %v214, %v184
    %v216 = vmax.f32 %v215, %v187
    %v217 = vmax.f32 %v216, %v192
    %v218 = vmax.f32 %v217, %v195
    %v219 = vmax.f32 %v218, %v200
    %v220 = vmax.f32 %v219, %v203
    %v221 = vmax.f32 %v220, %v208
    %v222 = vmax.f32 %v221, %v211
    %v223 = vld [vmem:[%s3] sm:$0x1]
    %v225 = vlaneseq
    %v226 = vshrl.u32 %v225, 7
    %v227 = vsub.s32 0, %v226
    %v228 = vrot.slane %v223, %v227
    %v230 = vadd.f32 %v222, %v228
    %v231 = vtanh.pop %v230
    %232 = vst [vmem:[#allocation2] sm:$0xff] %v231
    // Predicated region
    $region18: #{tpu_custom_call.1} parent=1 // pred_check
      _
    $region19: #{tpu_custom_call.1} parent=1 // pred_check_branch
      %234 = sbr.rel (0) target = $region21
    $region20: #{tpu_custom_call.1} parent=1 // pred_region
      %s236 = ssub.s32 128, 128
      %237 = vsyncadd [#allocation3], %s236
      %s239 = sshll.u32 [#allocation2], 4
      %s240 = int_to_ptr.vmem [resolvable:$true] %s239
      %242 = dma.vmem_to_hbm [thread:$0]  %s240, 128, %s4, [#allocation3]
    $region21: #{tpu_custom_call.1} parent=1 // pred_fallthru
      _
    // Predicated region
    $region22: #{tpu_custom_call.1} parent=1 // pred_check
      _
    $region23: #{tpu_custom_call.1} parent=1 // pred_check_branch
      %244 = sbr.rel (0) target = $region25
    $region24: #{tpu_custom_call.1} parent=1 // pred_region
      %245 = dma.done [#allocation3], 128
    $region25: #{tpu_custom_call.1} parent=1 // pred_fallthru
      _
    %246 = vsyncpa [#allocation3], 1

</llo_original>
